<compile_context>
chip_gen: v6e
topology: v6e:2x2x1
jax: 0.10.0
libtpu: 0.0.40
codegen_flags: <defaults>
</compile_context>

<pallas_src>
import functools

import jax
import jax.numpy as jnp
from jax.experimental import pallas as pl
from jax.experimental.pallas import tpu as pltpu


def _ce_label_smooth_kernel(x_ref, t_ref, loss_ref, *, epsilon, num_classes):
    # x_ref: (TILE_N, C) logits, t_ref: (TILE_N, 1) int32 labels,
    # loss_ref: (TILE_N, 1) per-sample smoothed CE loss.
    x = x_ref[...].astype(jnp.float32)               # (TILE_N, C)
    t = t_ref[...]                                   # (TILE_N, 1)
    tn, c = x.shape

    # Numerically stable logZ along the class (lane) axis.
    m = jnp.max(x, axis=1, keepdims=True)                             # (TILE_N, 1)
    logz = m + jnp.log(jnp.sum(jnp.exp(x - m), axis=1, keepdims=True))

    # x[i, t_i] via iota compare + masked row-sum (no scatter / one-hot tensor).
    cols = jax.lax.broadcasted_iota(jnp.int32, (tn, c), 1)
    tgt_logit = jnp.sum(jnp.where(cols == t, x, 0.0), axis=1, keepdims=True)
    sum_logits = jnp.sum(x, axis=1, keepdims=True)

    # loss_i = logZ_i - (1-eps) * x[i, t_i] - (eps/C) * sum_j x_ij
    loss_ref[...] = (logz
                     - (1.0 - epsilon) * tgt_logit
                     - (epsilon / num_classes) * sum_logits)


def _choose_tile_n(n, c, itemsize, target_block_bytes=4 * 1024 * 1024):
    """Rows per block: multiple of 8, block <= ~4 MiB, no larger than needed."""
    tile = target_block_bytes // max(1, c * itemsize)
    tile = max(8, min(2048, (tile // 8) * 8))
    n_ceil8 = ((n + 7) // 8) * 8
    return int(min(tile, n_ceil8))


def cross_entropy_label_smooth(inputs, targets, *, num_classes, epsilon=0.1,
                               size_average=True, tile_n=None):
    """inputs: (N, num_classes) float logits, targets: (N,) int class indices."""
    n, c = inputs.shape
    assert c == num_classes

    if tile_n is None:
        tile_n = _choose_tile_n(n, c, jnp.dtype(inputs.dtype).itemsize)
    n_tiles = pl.cdiv(n, tile_n)

    targets2d = targets.astype(jnp.int32).reshape(n, 1)

    kernel = functools.partial(
        _ce_label_smooth_kernel,
        epsilon=float(epsilon),
        num_classes=int(num_classes),
    )

    per = pl.pallas_call(
        kernel,
        out_shape=jax.ShapeDtypeStruct((n, 1), jnp.float32),
        grid=(n_tiles,),
        in_specs=[
            pl.BlockSpec((tile_n, c), lambda i: (i, 0)),
            pl.BlockSpec((tile_n, 1), lambda i: (i, 0)),
        ],
        out_specs=pl.BlockSpec((tile_n, 1), lambda i: (i, 0)),
        compiler_params=pltpu.CompilerParams(
            dimension_semantics=("parallel",),
            vmem_limit_bytes=32 * 1024 * 1024,
        ),
    )(inputs, targets2d)

    per = per[:, 0]
    if size_average:
        # (-t * log_probs).mean(0).sum() == sum_i loss_i / N
        return jnp.sum(per) / n
    return per


def _reference(inputs, targets, *, num_classes, epsilon=0.1, size_average=True):
    log_probs = jax.nn.log_softmax(inputs.astype(jnp.float32), axis=1)
    onehot = jax.nn.one_hot(targets, num_classes, dtype=jnp.float32)
    t = (1.0 - epsilon) * onehot + epsilon / num_classes
    if size_average:
        return (-t * log_probs).mean(0).sum()
    return (-t * log_probs).sum(1)


def _check(inputs, targets, num_classes, **kw):
    for size_average in (True, False):
        got = cross_entropy_label_smooth(inputs, targets,
                                         num_classes=num_classes,
                                         size_average=size_average, **kw)
        got = jax.block_until_ready(got)
        ref = _reference(inputs, targets, num_classes=num_classes,
                         epsilon=kw.get("epsilon", 0.1),
                         size_average=size_average)
        assert jnp.allclose(got, ref, atol=1e-5, rtol=1e-5), (got, ref)


if __name__ == "__main__":
    key = jax.random.PRNGKey(0)
    k1, k2, k3, k4, k5, k6 = jax.random.split(key, 6)

    # Case 1: module-default path, aligned small shapes.
    batch, num_classes = 8, 16
    inputs = jax.random.normal(k1, (batch, num_classes), dtype=jnp.float32)
    targets = jax.random.randint(k2, (batch,), 0, num_classes, dtype=jnp.int32)
    _check(inputs, targets, num_classes, epsilon=0.1)

    # Case 2: unaligned batch / class counts (ragged last block, no padding).
    batch2, num_classes2 = 13, 40
    inputs2 = jax.random.normal(k3, (batch2, num_classes2), dtype=jnp.float32)
    targets2 = jax.random.randint(k4, (batch2,), 0, num_classes2,
                                  dtype=jnp.int32)
    _check(inputs2, targets2, num_classes2, epsilon=0.1)

    # Case 3: force a multi-tile grid (3 tiles, ragged tail) with tile_n=8.
    batch3, num_classes3 = 20, 24
    inputs3 = jax.random.normal(k5, (batch3, num_classes3), dtype=jnp.float32)
    targets3 = jax.random.randint(k6, (batch3,), 0, num_classes3,
                                  dtype=jnp.int32)
    _check(inputs3, targets3, num_classes3, epsilon=0.2, tile_n=8)

    print("KERNEL_OK")
</pallas_src>

<mosaic_0001>
module attributes {stable_mosaic.version = 11 : i64} {
  func.func @_ce_label_smooth_kernel(%arg0: i32, %arg1: memref<8x16xf32, #tpu.memory_space<vmem>>, %arg2: memref<8x1xi32, #tpu.memory_space<vmem>>, %arg3: memref<8x1xf32, #tpu.memory_space<vmem>>) attributes {dimension_semantics = [#tpu.dimension_semantics<parallel>], iteration_bounds = array<i64: 1>, scalar_prefetch = 0 : i64, scratch_operands = 0 : i64, tpu.core_type = #tpu.core_type<tc>, window_params = [{transform_indices = @transform_0, window_bounds = array<i64: 8, 16>}, {transform_indices = @transform_1, window_bounds = array<i64: 8, 1>}, {transform_indices = @transform_2, window_bounds = array<i64: 8, 1>}]} {
    %c0 = arith.constant 0 : index
    %c0_0 = arith.constant 0 : index
    %0 = vector.load %arg1[%c0, %c0_0] : memref<8x16xf32, #tpu.memory_space<vmem>>, vector<8x16xf32>
    %c0_1 = arith.constant 0 : index
    %c0_2 = arith.constant 0 : index
    %1 = vector.load %arg2[%c0_1, %c0_2] : memref<8x1xi32, #tpu.memory_space<vmem>>, vector<8x1xi32>
    %cst = arith.constant dense<0xFF800000> : vector<8xf32>
    %2 = vector.multi_reduction <maximumf>, %0, %cst [1] : vector<8x16xf32> to vector<8xf32>
    %3 = vector.shape_cast %2 : vector<8xf32> to vector<8x1xf32>
    %4 = vector.broadcast %3 : vector<8x1xf32> to vector<8x16xf32>
    %5 = arith.subf %0, %4 : vector<8x16xf32>
    %6 = math.exp %5 : vector<8x16xf32>
    %cst_3 = arith.constant dense<0.000000e+00> : vector<8xf32>
    %7 = vector.multi_reduction <add>, %6, %cst_3 [1] : vector<8x16xf32> to vector<8xf32>
    %8 = vector.shape_cast %7 : vector<8xf32> to vector<8x1xf32>
    %9 = math.log %8 : vector<8x1xf32>
    %10 = arith.addf %3, %9 : vector<8x1xf32>
    %11 = tpu.iota {dimensions = array<i32: 1>} : vector<8x16xi32>
    %12 = vector.broadcast %1 : vector<8x1xi32> to vector<8x16xi32>
    %13 = arith.cmpi eq, %11, %12 : vector<8x16xi32>
    %cst_4 = arith.constant 0.000000e+00 : f32
    %14 = vector.broadcast %cst_4 : f32 to vector<8x16xf32>
    %15 = arith.select %13, %0, %14 : vector<8x16xi1>, vector<8x16xf32>
    %cst_5 = arith.constant dense<0.000000e+00> : vector<8xf32>
    %16 = vector.multi_reduction <add>, %15, %cst_5 [1] : vector<8x16xf32> to vector<8xf32>
    %17 = vector.shape_cast %16 : vector<8xf32> to vector<8x1xf32>
    %cst_6 = arith.constant dense<0.000000e+00> : vector<8xf32>
    %18 = vector.multi_reduction <add>, %0, %cst_6 [1] : vector<8x16xf32> to vector<8xf32>
    %19 = vector.shape_cast %18 : vector<8xf32> to vector<8x1xf32>
    %cst_7 = arith.constant 0.899999976 : f32
    %20 = vector.broadcast %cst_7 : f32 to vector<8x1xf32>
    %21 = arith.mulf %20, %17 : vector<8x1xf32>
    %22 = arith.subf %10, %21 : vector<8x1xf32>
    %cst_8 = arith.constant 6.250000e-03 : f32
    %23 = vector.broadcast %cst_8 : f32 to vector<8x1xf32>
    %24 = arith.mulf %23, %19 : vector<8x1xf32>
    %25 = arith.subf %22, %24 : vector<8x1xf32>
    %c0_9 = arith.constant 0 : index
    %c0_10 = arith.constant 0 : index
    %26 = vector.load %arg3[%c0_9, %c0_10] : memref<8x1xf32, #tpu.memory_space<vmem>>, vector<8x1xf32>
    tpu.vector_store %arg3[%c0_9, %c0_10], %25 {strides = array<i32>} : memref<8x1xf32, #tpu.memory_space<vmem>>, vector<8x1xf32>,
    return
  }
  func.func @transform_0(%arg0: i32) -> (i32, i32) {
    %c0_i32 = arith.constant 0 : i32
    %c0_i32_0 = arith.constant 0 : i32
    return %arg0, %c0_i32 : i32, i32
  }
  func.func @transform_1(%arg0: i32) -> (i32, i32) {
    %c0_i32 = arith.constant 0 : i32
    %c0_i32_0 = arith.constant 0 : i32
    return %arg0, %c0_i32 : i32, i32
  }
  func.func @transform_2(%arg0: i32) -> (i32, i32) {
    %c0_i32 = arith.constant 0 : i32
    %c0_i32_0 = arith.constant 0 : i32
    return %arg0, %c0_i32 : i32, i32
  }
}

</mosaic_0001>

<llo_original>
// kernel: tpu_custom_call.1
$region0: #{tpu_custom_call.1}
  #allocation0 [shape = 'u32[]', space=smem, size = 0x4, offset = 0x4, fixed_abs, tag = 'smem constant byte address 0x4 - core index']
  #allocation1 [shape = 'u32[144,128]{1,0:T(1,128)}', space=vmem, size = 0x12000, scoped, tag = 'internal scratch']
  %s0 = inlined_call_operand.vmem [shape: f32[8,16], index: 0, kind: input, shape index: {}]
  %s1 = inlined_call_operand.vmem [shape: s32[8,1], index: 1, kind: input, shape index: {}]
  %s2 = inlined_call_operand.vmem [shape: f32[8,1], index: 2, kind: output, shape index: {}]
  %s3 = sld [smem:[#allocation0]]
  $region18: #{tpu_custom_call.1} parent=0
    _
  %s5 = ssub.s32 1, %s3
  %s6 = scalar_select 0, %s5, %s3
  // Predicated region
  $region2: #{tpu_custom_call.1} parent=0 // pred_check
    _
  $region3: #{tpu_custom_call.1} parent=0 // pred_check_branch
    %8 = sbr.rel (0) target = $region5
  $region4: #{tpu_custom_call.1} parent=0 // pred_region
    _
  $region5: #{tpu_custom_call.1} parent=0 // pred_fallthru
    _
  // Predicated region
  $region6: #{tpu_custom_call.1} parent=0 // pred_check
    _
  $region7: #{tpu_custom_call.1} parent=0 // pred_check_branch
    %10 = sbr.rel (0) target = $region9
  $region8: #{tpu_custom_call.1} parent=0 // pred_region
    _
  $region9: #{tpu_custom_call.1} parent=0 // pred_fallthru
    _
  %v11 = vld [vmem:[%s0] sm:$0xff]
  %v12 = vld [vmem:[%s1] sm:$0xff]
  %vm13 = vcmask 130048
  %v14 = vsel %vm13, %v11, -inf
  %15 = vmax.xlane.f32.xlu0 %v14
  %v16 = vpop.xlane.xlu0 %15
  %v17 = vsub.f32 %v11, %v16
  %v18 = vmul.f32 %v17, 1.442695
  %v19 = vpow.pop %v18
  %v20 = vsel %vm13, %v19, 0.0
  %21 = vadd.xlane.f32.xlu0 %v20
  %v22 = vpop.xlane.xlu0 %21
  %v23 = vlog2.pop %v22
  %v24 = vmul.f32 %v23, 0.6931472
  %v25 = vadd.f32 %v16, %v24
  %v26 = vlaneseq
  %v27 = vand.u32 %v26, 127
  %28 = vset.pattern.permute.xlu0 0
  %29 = vperm.xlu0 %28, %v12
  %v30 = vpop.permute.xlu0 %29
  %vm31 = vcmp.eq.s32.totalorder %v27, %v30
  %v32 = vsel %vm31, %v11, 0.0
  %v33 = vsel %vm13, %v32, 0.0
  %34 = vadd.xlane.f32.xlu0 %v33
  %v35 = vpop.xlane.xlu0 %34
  %v36 = vsel %vm13, %v11, 0.0
  %37 = vadd.xlane.f32.xlu0 %v36
  %v38 = vpop.xlane.xlu0 %37
  %v39 = vmul.f32 %v35, 0.9
  %v40 = vsub.f32 %v25, %v39
  %v41 = vmul.f32 %v38, 0.00625
  %v42 = vsub.f32 %v40, %v41
  %vm43 = vcmask 7168
  %44 = vst.msk [vmem:[%s2] sm:$0xff] %vm43, %v42
  // Predicated region
  $region10: #{tpu_custom_call.1} parent=0 // pred_check
    _
  $region11: #{tpu_custom_call.1} parent=0 // pred_check_branch
    %46 = sbr.rel (0) target = $region13
  $region12: #{tpu_custom_call.1} parent=0 // pred_region
    _
  $region13: #{tpu_custom_call.1} parent=0 // pred_fallthru
    _
  // Predicated region
  $region14: #{tpu_custom_call.1} parent=0 // pred_check
    _
  $region15: #{tpu_custom_call.1} parent=0 // pred_check_branch
    %48 = sbr.rel (0) target = $region17
  $region16: #{tpu_custom_call.1} parent=0 // pred_region
    _
  $region17: #{tpu_custom_call.1} parent=0 // pred_fallthru
    _

</llo_original>
